<compile_context>
chip_gen: v5e
topology: v5e:2x2
jax: 0.10.0
libtpu: 0.0.40
codegen_flags: <defaults>
</compile_context>

<pallas_src>
import jax
import jax.numpy as jnp
import numpy as np
from jax.experimental import pallas as pl
from jax.experimental.pallas import tpu as pltpu


def _round_up(n, m):
    return ((n + m - 1) // m) * m


def actor_kernel(x_ref, w1_ref, b1_ref, w2_ref, b2_ref, w3_ref, b3_ref, out_ref):
    # Cast the f32 state tile to bf16 inside VMEM (x is read from HBM as raw f32).
    x = x_ref[...].astype(jnp.bfloat16)
    # fc1 + ReLU   (bf16 MXU matmul, f32 accumulate, bf16 intermediate)
    h1 = jnp.dot(x, w1_ref[...], preferred_element_type=jnp.float32)
    h1 = jnp.maximum(h1 + b1_ref[...], 0.0).astype(jnp.bfloat16)
    # fc2 + ReLU
    h2 = jnp.dot(h1, w2_ref[...], preferred_element_type=jnp.float32)
    h2 = jnp.maximum(h2 + b2_ref[...], 0.0).astype(jnp.bfloat16)
    # fc3 + tanh, written directly to the narrow (TB, action_size) f32 output.
    h3 = jnp.dot(h2, w3_ref[...], preferred_element_type=jnp.float32)
    out_ref[...] = jnp.tanh(h3 + b3_ref[...]).astype(out_ref.dtype)


def actor_forward(x, params, *, batch_tile=1024, small_batch_cutoff=256):
    """x: (B, state_size) float32.  params: pre-transposed bf16 weights / f32 biases.

    batch_tile: max rows per grid step (1024 default; v5e/v6e with 128 MiB VMEM can
    go 2048).  small_batch_cutoff: below this, use an un-pipelined grid=() shot.
    """
    w1, b1, w2, b2, w3, b3 = (params["w1"], params["b1"], params["w2"],
                              params["b2"], params["w3"], params["b3"])
    B, S = x.shape
    H1 = w1.shape[1]
    H2 = w2.shape[1]
    A = w3.shape[1]

    flops = 2 * B * (S * H1 + H1 * H2 + H2 * A)
    bytes_accessed = (B * S * 4 + (w1.size + w2.size + w3.size) * 2
                      + (b1.size + b2.size + b3.size) * 4 + B * A * 4)
    cost = pl.CostEstimate(flops=flops, transcendentals=B * A,
                           bytes_accessed=bytes_accessed)

    args = (x, w1, b1, w2, b2, w3, b3)

    if B <= small_batch_cutoff:
        # Small batch: one un-pipelined shot; per-step grid overhead would dominate.
        # TODO(synk): for repeated small-batch inference with fixed weights, a
        # cross-call weight prefetch (P10) would amortize the ~300 KiB weight DMA.
        full = lambda a: pl.BlockSpec(a.shape, lambda: (0,) * a.ndim)
        return pl.pallas_call(
            actor_kernel,
            out_shape=jax.ShapeDtypeStruct((B, A), jnp.float32),
            grid=(),
            in_specs=[full(a) for a in args],
            out_specs=pl.BlockSpec((B, A), lambda: (0, 0)),
            cost_estimate=cost,
        )(*args)

    # Tiled path: tile the batch, keep weights/biases VMEM-resident (constant block
    # index), mark the batch axis parallel (megacore / 2 TCs on v7x).  Guarantee at
    # least 2 tiles so both TensorCores get work on medium batches.
    TB = min(batch_tile, max(8, _round_up(-(-B // 2), 8)))
    B_pad = _round_up(B, TB)
    x_p = jnp.pad(x, ((0, B_pad - B), (0, 0))) if B_pad != B else x
    n_tiles = B_pad // TB

    const = lambda a: pl.BlockSpec(a.shape, lambda i: (0,) * a.ndim)
    out_p = pl.pallas_call(
        actor_kernel,
        out_shape=jax.ShapeDtypeStruct((B_pad, A), jnp.float32),
        grid=(n_tiles,),
        in_specs=[pl.BlockSpec((TB, S), lambda i: (i, 0)),
                  const(w1), const(b1), const(w2), const(b2),
                  const(w3), const(b3)],
        out_specs=pl.BlockSpec((TB, A), lambda i: (i, 0)),
        compiler_params=pltpu.CompilerParams(
            dimension_semantics=("parallel",)),
        cost_estimate=cost,
    )(x_p, w1, b1, w2, b2, w3, b3)
    return out_p[:B] if B_pad != B else out_p


def init_actor_params(key, state_size, action_size, fc_units=(512, 256)):
    """Deterministic init mirroring the PyTorch module's reset_parameters().

    Weights are stored pre-transposed (in, out) and cast to bf16; biases stay f32
    and keep PyTorch's nn.Linear default init (reset_parameters only re-inits weights).
    """
    h1, h2 = fc_units
    k1, k2, k3, kb1, kb2, kb3 = jax.random.split(key, 6)

    # hidden_init uses weight.size()[0] == out_features as "fan_in" (module quirk).
    lim1 = 1.0 / np.sqrt(h1)
    lim2 = 1.0 / np.sqrt(h2)
    lim3 = 0.003

    w1 = jax.random.uniform(k1, (state_size, h1), jnp.float32, -lim1, lim1)
    w2 = jax.random.uniform(k2, (h1, h2), jnp.float32, -lim2, lim2)
    w3 = jax.random.uniform(k3, (h2, action_size), jnp.float32, -lim3, lim3)

    # Biases: PyTorch Linear default init uniform(+-1/sqrt(in_features)), kept 2D.
    b1 = jax.random.uniform(kb1, (1, h1), jnp.float32,
                            -1.0 / np.sqrt(state_size), 1.0 / np.sqrt(state_size))
    b2 = jax.random.uniform(kb2, (1, h2), jnp.float32,
                            -1.0 / np.sqrt(h1), 1.0 / np.sqrt(h1))
    b3 = jax.random.uniform(kb3, (1, action_size), jnp.float32,
                            -1.0 / np.sqrt(h2), 1.0 / np.sqrt(h2))

    return {"w1": w1.astype(jnp.bfloat16), "b1": b1,
            "w2": w2.astype(jnp.bfloat16), "b2": b2,
            "w3": w3.astype(jnp.bfloat16), "b3": b3}


def actor_reference(x, params):
    """Plain-JAX reference replicating the kernel's bf16-input / f32-accum pipeline."""
    f32 = jnp.float32
    x_b = x.astype(jnp.bfloat16).astype(f32)
    w1, w2, w3 = (params["w1"].astype(f32), params["w2"].astype(f32),
                  params["w3"].astype(f32))
    h1 = jnp.maximum(x_b @ w1 + params["b1"], 0.0).astype(jnp.bfloat16).astype(f32)
    h2 = jnp.maximum(h1 @ w2 + params["b2"], 0.0).astype(jnp.bfloat16).astype(f32)
    return jnp.tanh(h2 @ w3 + params["b3"])


if __name__ == "__main__":
    key = jax.random.PRNGKey(0)
    k_params, k_state, k_state_big = jax.random.split(key, 3)

    batch = 8
    state_size = 32
    action_size = 8
    fc_units = (512, 256)

    params = init_actor_params(k_params, state_size, action_size, fc_units)

    # Small batch: single-shot grid=() path.
    state = jax.random.normal(k_state, (batch, state_size), jnp.float32)
    out = actor_forward(state, params)
    jax.block_until_ready(out)
    ref = actor_reference(state, params)
    assert out.shape == (batch, action_size)
    assert jnp.allclose(out, ref, atol=2e-3, rtol=2e-3)

    # Larger batch: exercises the tiled, parallel-grid path (>= 2 tiles) with
    # VMEM-resident weights.
    big_batch = 512
    state_big = jax.random.normal(k_state_big, (big_batch, state_size), jnp.float32)
    out_big = actor_forward(state_big, params)
    jax.block_until_ready(out_big)
    ref_big = actor_reference(state_big, params)
    assert out_big.shape == (big_batch, action_size)
    assert jnp.allclose(out_big, ref_big, atol=2e-3, rtol=2e-3)

    print("KERNEL_OK")
</pallas_src>

<mosaic_0001>
module attributes {stable_mosaic.version = 11 : i64} {
  func.func @actor_kernel(%arg0: memref<8x32xf32, #tpu.memory_space<vmem>>, %arg1: memref<32x512xbf16, #tpu.memory_space<vmem>>, %arg2: memref<1x512xf32, #tpu.memory_space<vmem>>, %arg3: memref<512x256xbf16, #tpu.memory_space<vmem>>, %arg4: memref<1x256xf32, #tpu.memory_space<vmem>>, %arg5: memref<256x8xbf16, #tpu.memory_space<vmem>>, %arg6: memref<1x8xf32, #tpu.memory_space<vmem>>, %arg7: memref<8x8xf32, #tpu.memory_space<vmem>>) attributes {dimension_semantics = [], scalar_prefetch = 0 : i64, scratch_operands = 0 : i64, tpu.core_type = #tpu.core_type<tc>} {
    %c0 = arith.constant 0 : index
    %c0_0 = arith.constant 0 : index
    %0 = vector.load %arg0[%c0, %c0_0] : memref<8x32xf32, #tpu.memory_space<vmem>>, vector<8x32xf32>
    %1 = arith.truncf %0 : vector<8x32xf32> to vector<8x32xbf16>
    %c0_1 = arith.constant 0 : index
    %c0_2 = arith.constant 0 : index
    %2 = vector.load %arg1[%c0_1, %c0_2] : memref<32x512xbf16, #tpu.memory_space<vmem>>, vector<32x512xbf16>
    %cst = arith.constant dense<0.000000e+00> : vector<8x512xf32>
    %3 = tpu.matmul %1, %2, %cst {dimension_numbers = #tpu.dot_dimension_numbers<[1], [0], [0], [1], [0, 0, 1, 1], [], []>} : vector<8x32xbf16>, vector<32x512xbf16>, vector<8x512xf32> -> vector<8x512xf32>
    %c0_3 = arith.constant 0 : index
    %c0_4 = arith.constant 0 : index
    %4 = vector.load %arg2[%c0_3, %c0_4] : memref<1x512xf32, #tpu.memory_space<vmem>>, vector<1x512xf32>
    %5 = vector.broadcast %4 : vector<1x512xf32> to vector<8x512xf32>
    %6 = arith.addf %3, %5 : vector<8x512xf32>
    %cst_5 = arith.constant 0.000000e+00 : f32
    %7 = vector.broadcast %cst_5 : f32 to vector<8x512xf32>
    %8 = arith.maximumf %6, %7 : vector<8x512xf32>
    %9 = arith.truncf %8 : vector<8x512xf32> to vector<8x512xbf16>
    %c0_6 = arith.constant 0 : index
    %c0_7 = arith.constant 0 : index
    %10 = vector.load %arg3[%c0_6, %c0_7] : memref<512x256xbf16, #tpu.memory_space<vmem>>, vector<512x256xbf16>
    %cst_8 = arith.constant dense<0.000000e+00> : vector<8x256xf32>
    %11 = tpu.matmul %9, %10, %cst_8 {dimension_numbers = #tpu.dot_dimension_numbers<[1], [0], [0], [1], [0, 0, 1, 1], [], []>} : vector<8x512xbf16>, vector<512x256xbf16>, vector<8x256xf32> -> vector<8x256xf32>
    %c0_9 = arith.constant 0 : index
    %c0_10 = arith.constant 0 : index
    %12 = vector.load %arg4[%c0_9, %c0_10] : memref<1x256xf32, #tpu.memory_space<vmem>>, vector<1x256xf32>
    %13 = vector.broadcast %12 : vector<1x256xf32> to vector<8x256xf32>
    %14 = arith.addf %11, %13 : vector<8x256xf32>
    %cst_11 = arith.constant 0.000000e+00 : f32
    %15 = vector.broadcast %cst_11 : f32 to vector<8x256xf32>
    %16 = arith.maximumf %14, %15 : vector<8x256xf32>
    %17 = arith.truncf %16 : vector<8x256xf32> to vector<8x256xbf16>
    %c0_12 = arith.constant 0 : index
    %c0_13 = arith.constant 0 : index
    %18 = vector.load %arg5[%c0_12, %c0_13] : memref<256x8xbf16, #tpu.memory_space<vmem>>, vector<256x8xbf16>
    %cst_14 = arith.constant dense<0.000000e+00> : vector<8x8xf32>
    %19 = tpu.matmul %17, %18, %cst_14 {dimension_numbers = #tpu.dot_dimension_numbers<[1], [0], [0], [1], [0, 0, 1, 1], [], []>} : vector<8x256xbf16>, vector<256x8xbf16>, vector<8x8xf32> -> vector<8x8xf32>
    %c0_15 = arith.constant 0 : index
    %c0_16 = arith.constant 0 : index
    %20 = vector.load %arg6[%c0_15, %c0_16] : memref<1x8xf32, #tpu.memory_space<vmem>>, vector<1x8xf32>
    %21 = vector.broadcast %20 : vector<1x8xf32> to vector<8x8xf32>
    %22 = arith.addf %19, %21 : vector<8x8xf32>
    %23 = math.tanh %22 : vector<8x8xf32>
    %c0_17 = arith.constant 0 : index
    %c0_18 = arith.constant 0 : index
    %24 = vector.load %arg7[%c0_17, %c0_18] : memref<8x8xf32, #tpu.memory_space<vmem>>, vector<8x8xf32>
    tpu.vector_store %arg7[%c0_17, %c0_18], %23 {strides = array<i32>} : memref<8x8xf32, #tpu.memory_space<vmem>>, vector<8x8xf32>,
    return
  }
}

</mosaic_0001>

<llo_original>
// kernel: tpu_custom_call.1
$region0: #{tpu_custom_call.1}
  #allocation0 [shape = 'u32[]', space=smem, size = 0x4, offset = 0x4, fixed_abs, tag = 'smem constant byte address 0x4 - core index']
  #allocation1 [shape = 'u32[72,128]{1,0:T(1,128)}', space=vmem, size = 0x9000, scoped, tag = 'internal scratch']
  %s0 = inlined_call_operand.vmem [shape: f32[8,32], index: 0, kind: input, shape index: {}]
  %s1 = inlined_call_operand.vmem [shape: bf16[32,512], index: 1, kind: input, shape index: {}]
  %s2 = inlined_call_operand.vmem [shape: f32[1,512], index: 2, kind: input, shape index: {}]
  %s3 = inlined_call_operand.hbm [shape: bf16[512,256], index: 3, kind: input, shape index: {}]
  %s4 = inlined_call_operand.vmem [shape: f32[1,256], index: 4, kind: input, shape index: {}]
  %s5 = inlined_call_operand.vmem [shape: bf16[256,8], index: 5, kind: input, shape index: {}]
  %s6 = inlined_call_operand.vmem [shape: f32[1,8], index: 6, kind: input, shape index: {}]
  %s7 = inlined_call_operand.hbm [shape: f32[8,8], index: 7, kind: output, shape index: {}]
  %s8 = sld [smem:[#allocation0]]
  $region42: #{tpu_custom_call.1} parent=0
    _
  %s10 = ssub.s32 1, %s8
  %s11 = scalar_select 0, %s10, %s8
  $region1: #{tpu_custom_call.1} parent=0
    #allocation2 [shape = 'u8[262144]{0}', space=vmem, size = 0x40000, scoped, tag = 'input window, operand 3, single buffered']
    #allocation3 [shape = 's32[1]{0}', space=sflag, size = 0x4, scoped, tag = 'scoped memory for tpu_custom_call.1']
    #allocation4 [shape = 's32[1]{0}', space=sflag, size = 0x4, scoped, tag = 'scoped memory for tpu_custom_call.1']
    #allocation5 [shape = 'u8[4096]{0}', space=vmem, size = 0x1000, scoped, tag = 'output window, operand 0, single buffered']
    %12 = vsyncpa [#allocation3], 0
    %13 = vsyncpa [#allocation4], 0
    // Predicated region
    $region2: #{tpu_custom_call.1} parent=1 // pred_check
      _
    $region3: #{tpu_custom_call.1} parent=1 // pred_check_branch
      %15 = sbr.rel (0) target = $region5
    $region4: #{tpu_custom_call.1} parent=1 // pred_region
      _
    $region5: #{tpu_custom_call.1} parent=1 // pred_fallthru
      _
    // Predicated region
    $region6: #{tpu_custom_call.1} parent=1 // pred_check
      _
    $region7: #{tpu_custom_call.1} parent=1 // pred_check_branch
      %17 = sbr.rel (0) target = $region9
    $region8: #{tpu_custom_call.1} parent=1 // pred_region
      _
    $region9: #{tpu_custom_call.1} parent=1 // pred_fallthru
      _
    // Predicated region
    $region10: #{tpu_custom_call.1} parent=1 // pred_check
      _
    $region11: #{tpu_custom_call.1} parent=1 // pred_check_branch
      %19 = sbr.rel (0) target = $region13
    $region12: #{tpu_custom_call.1} parent=1 // pred_region
      _
    $region13: #{tpu_custom_call.1} parent=1 // pred_fallthru
      _
    // Predicated region
    $region14: #{tpu_custom_call.1} parent=1 // pred_check
      _
    $region15: #{tpu_custom_call.1} parent=1 // pred_check_branch
      %21 = sbr.rel (0) target = $region17
    $region16: #{tpu_custom_call.1} parent=1 // pred_region
      %23 = vsyncadd [#allocation3], 0
      %s24 = sshll.u32 %s3, 4
      %s25 = int_to_ptr.hbm [resolvable:$true] %s24
      %s26 = sshll.u32 [#allocation2], 4
      %s27 = int_to_ptr.vmem [resolvable:$true] %s26
      %32 = dma.hbm_to_vmem [thread:$0]  %s25, 8192, %s27, [#allocation3], 128, 128, 8
    $region17: #{tpu_custom_call.1} parent=1 // pred_fallthru
      _
    // Predicated region
    $region18: #{tpu_custom_call.1} parent=1 // pred_check
      _
    $region19: #{tpu_custom_call.1} parent=1 // pred_check_branch
      %34 = sbr.rel (0) target = $region21
    $region20: #{tpu_custom_call.1} parent=1 // pred_region
      _
    $region21: #{tpu_custom_call.1} parent=1 // pred_fallthru
      _
    // Predicated region
    $region22: #{tpu_custom_call.1} parent=1 // pred_check
      _
    $region23: #{tpu_custom_call.1} parent=1 // pred_check_branch
      %36 = sbr.rel (0) target = $region25
    $region24: #{tpu_custom_call.1} parent=1 // pred_region
      _
    $region25: #{tpu_custom_call.1} parent=1 // pred_fallthru
      _
    // Predicated region
    $region26: #{tpu_custom_call.1} parent=1 // pred_check
      _
    $region27: #{tpu_custom_call.1} parent=1 // pred_check_branch
      %38 = sbr.rel (0) target = $region29
    $region28: #{tpu_custom_call.1} parent=1 // pred_region
      _
    $region29: #{tpu_custom_call.1} parent=1 // pred_fallthru
      _
    // Predicated region
    $region30: #{tpu_custom_call.1} parent=1 // pred_check
      _
    $region31: #{tpu_custom_call.1} parent=1 // pred_check_branch
      %40 = sbr.rel (0) target = $region33
    $region32: #{tpu_custom_call.1} parent=1 // pred_region
      %42 = dma.done [#allocation3], 8192
    $region33: #{tpu_custom_call.1} parent=1 // pred_fallthru
      _
    %v44 = vld [vmem:[%s0] sm:$0xff]
    %v45 = vpack.c.bf16 %v44, %v44
    %v46 = vld [vmem:[%s1] sm:$0xff]
    %v47 = vld [vmem:[%s1 + $0x8] sm:$0xff]
    %v48 = vld [vmem:[%s1 + $0x10] sm:$0xff]
    %v49 = vld [vmem:[%s1 + $0x18] sm:$0xff]
    %v50 = vld [vmem:[%s1 + $0x20] sm:$0xff]
    %v51 = vld [vmem:[%s1 + $0x28] sm:$0xff]
    %v52 = vld [vmem:[%s1 + $0x30] sm:$0xff]
    %v53 = vld [vmem:[%s1 + $0x38] sm:$0xff]
    %v54 = vld [vmem:[%s2] sm:$0xf]
    %v56 = vperm.slane %v54, 0
    %v57 = vperm.slane %v54, 1
    %v58 = vperm.slane %v54, 2
    %v59 = vperm.slane %v54, 3
    %v72 = vunpack.c.l.b16 %v46
    %v73 = vunpack.c.h.b16 %v46
    %v74 = vunpack.c.l.b16 %v47
    %v75 = vunpack.c.h.b16 %v47
    %v76 = vunpack.c.l.b16 %v48
    %v77 = vunpack.c.h.b16 %v48
    %v78 = vunpack.c.l.b16 %v49
    %v79 = vunpack.c.h.b16 %v49
    %v80 = vunpack.c.l.b16 %v50
    %v81 = vunpack.c.h.b16 %v50
    %v82 = vunpack.c.l.b16 %v51
    %v83 = vunpack.c.h.b16 %v51
    %v84 = vunpack.c.l.b16 %v52
    %v85 = vunpack.c.h.b16 %v52
    %v86 = vunpack.c.l.b16 %v53
    %v87 = vunpack.c.h.b16 %v53
    %v88 = vpack.c.b16 %v76, %v72
    %v89 = vpack.c.b16 %v77, %v73
    %v90 = vpack.c.b16 %v78, %v74
    %v91 = vpack.c.b16 %v79, %v75
    %v92 = vpack.c.b16 %v84, %v80
    %v93 = vpack.c.b16 %v85, %v81
    %v94 = vpack.c.b16 %v86, %v82
    %v95 = vpack.c.b16 %v87, %v83
    %vm104 = vcmask 261120
    %v106 = vsel %vm104, %v45, 0
    %108 = vmatpush.bf16.msra.mxu0 0
    %109 = vmatpush.bf16.msra.mxu0 0
    %110 = vmatpush.bf16.msra.mxu0 0
    %111 = vmatpush.bf16.msra.mxu0 0
    %112 = vmatpush.bf16.msra.mxu0 0
    %113 = vmatpush.bf16.msra.mxu0 0
    %114 = vmatpush.bf16.msra.mxu0 %v92
    %115 = vmatpush.bf16.msra.mxu0 %v88
    %116 = vmatmul.bf16.gmra.mxu0 %v106
    %v117 = vpop.f32.mrf.mxu0
    %v118 = vadd.f32 %v56, %v117
    %v119 = vpop.f32.mrf.mxu0
    %120 = vdwg.mxu0
    %121 = vmatpush.bf16.msra.mxu0 0
    %122 = vmatpush.bf16.msra.mxu0 0
    %123 = vmatpush.bf16.msra.mxu0 0
    %124 = vmatpush.bf16.msra.mxu0 0
    %125 = vmatpush.bf16.msra.mxu0 0
    %126 = vmatpush.bf16.msra.mxu0 0
    %127 = vmatpush.bf16.msra.mxu0 %v93
    %128 = vmatpush.bf16.msra.mxu0 %v89
    %129 = vmatmul.bf16.gmra.mxu0 %v106
    %v130 = vpop.f32.mrf.mxu0
    %v131 = vadd.f32 %v57, %v130
    %v132 = vpop.f32.mrf.mxu0
    %133 = vdwg.mxu0
    %134 = vmatpush.bf16.msra.mxu0 0
    %135 = vmatpush.bf16.msra.mxu0 0
    %136 = vmatpush.bf16.msra.mxu0 0
    %137 = vmatpush.bf16.msra.mxu0 0
    %138 = vmatpush.bf16.msra.mxu0 0
    %139 = vmatpush.bf16.msra.mxu0 0
    %140 = vmatpush.bf16.msra.mxu0 %v94
    %141 = vmatpush.bf16.msra.mxu0 %v90
    %142 = vmatmul.bf16.gmra.mxu0 %v106
    %v143 = vpop.f32.mrf.mxu0
    %v144 = vadd.f32 %v58, %v143
    %v145 = vpop.f32.mrf.mxu0
    %146 = vdwg.mxu0
    %147 = vmatpush.bf16.msra.mxu0 0
    %148 = vmatpush.bf16.msra.mxu0 0
    %149 = vmatpush.bf16.msra.mxu0 0
    %150 = vmatpush.bf16.msra.mxu0 0
    %151 = vmatpush.bf16.msra.mxu0 0
    %152 = vmatpush.bf16.msra.mxu0 0
    %153 = vmatpush.bf16.msra.mxu0 %v95
    %154 = vmatpush.bf16.msra.mxu0 %v91
    %155 = vmatmul.bf16.gmra.mxu0 %v106
    %v156 = vpop.f32.mrf.mxu0
    %v157 = vadd.f32 %v59, %v156
    %v158 = vpop.f32.mrf.mxu0
    %159 = vdwg.mxu0
    %v160 = vmax.f32 %v118, 0.0
    %v161 = vmax.f32 %v131, 0.0
    %v162 = vmax.f32 %v144, 0.0
    %v163 = vmax.f32 %v157, 0.0
    %v164 = vpack.c.bf16 %v160, %v160
    %v165 = vpack.c.bf16 %v161, %v161
    %v166 = vpack.c.bf16 %v162, %v162
    %v167 = vpack.c.bf16 %v163, %v163
    %v168 = vld [vmem:[#allocation2] sm:$0xff]
    %v169 = vld [vmem:[#allocation2 + $0x8] sm:$0xff]
    %v170 = vld [vmem:[#allocation2 + $0x10] sm:$0xff]
    %v171 = vld [vmem:[#allocation2 + $0x18] sm:$0xff]
    %v172 = vld [vmem:[#allocation2 + $0x20] sm:$0xff]
    %v173 = vld [vmem:[#allocation2 + $0x28] sm:$0xff]
    %v174 = vld [vmem:[#allocation2 + $0x30] sm:$0xff]
    %v175 = vld [vmem:[#allocation2 + $0x38] sm:$0xff]
    %v176 = vld [vmem:[#allocation2 + $0x40] sm:$0xff]
    %v177 = vld [vmem:[#allocation2 + $0x48] sm:$0xff]
    %v178 = vld [vmem:[#allocation2 + $0x50] sm:$0xff]
    %v179 = vld [vmem:[#allocation2 + $0x58] sm:$0xff]
    %v180 = vld [vmem:[#allocation2 + $0x60] sm:$0xff]
    %v181 = vld [vmem:[#allocation2 + $0x68] sm:$0xff]
    %v182 = vld [vmem:[#allocation2 + $0x70] sm:$0xff]
    %v183 = vld [vmem:[#allocation2 + $0x78] sm:$0xff]
    %v184 = vld [vmem:[#allocation2 + $0x80] sm:$0xff]
    %v185 = vld [vmem:[#allocation2 + $0x88] sm:$0xff]
    %v186 = vld [vmem:[#allocation2 + $0x90] sm:$0xff]
    %v187 = vld [vmem:[#allocation2 + $0x98] sm:$0xff]
    %v188 = vld [vmem:[#allocation2 + $0xa0] sm:$0xff]
    %v189 = vld [vmem:[#allocation2 + $0xa8] sm:$0xff]
    %v190 = vld [vmem:[#allocation2 + $0xb0] sm:$0xff]
    %v191 = vld [vmem:[#allocation2 + $0xb8] sm:$0xff]
    %v192 = vld [vmem:[#allocation2 + $0xc0] sm:$0xff]
    %v193 = vld [vmem:[#allocation2 + $0xc8] sm:$0xff]
    %v194 = vld [vmem:[#allocation2 + $0xd0] sm:$0xff]
    %v195 = vld [vmem:[#allocation2 + $0xd8] sm:$0xff]
    %v196 = vld [vmem:[#allocation2 + $0xe0] sm:$0xff]
    %v197 = vld [vmem:[#allocation2 + $0xe8] sm:$0xff]
    %v198 = vld [vmem:[#allocation2 + $0xf0] sm:$0xff]
    %v199 = vld [vmem:[#allocation2 + $0xf8] sm:$0xff]
    %v200 = vld [vmem:[#allocation2 + $0x100] sm:$0xff]
    %v201 = vld [vmem:[#allocation2 + $0x108] sm:$0xff]
    %v202 = vld [vmem:[#allocation2 + $0x110] sm:$0xff]
    %v203 = vld [vmem:[#allocation2 + $0x118] sm:$0xff]
    %v204 = vld [vmem:[#allocation2 + $0x120] sm:$0xff]
    %v205 = vld [vmem:[#allocation2 + $0x128] sm:$0xff]
    %v206 = vld [vmem:[#allocation2 + $0x130] sm:$0xff]
    %v207 = vld [vmem:[#allocation2 + $0x138] sm:$0xff]
    %v208 = vld [vmem:[#allocation2 + $0x140] sm:$0xff]
    %v209 = vld [vmem:[#allocation2 + $0x148] sm:$0xff]
    %v210 = vld [vmem:[#allocation2 + $0x150] sm:$0xff]
    %v211 = vld [vmem:[#allocation2 + $0x158] sm:$0xff]
    %v212 = vld [vmem:[#allocation2 + $0x160] sm:$0xff]
    %v213 = vld [vmem:[#allocation2 + $0x168] sm:$0xff]
    %v214 = vld [vmem:[#allocation2 + $0x170] sm:$0xff]
    %v215 = vld [vmem:[#allocation2 + $0x178] sm:$0xff]
    %v216 = vld [vmem:[#allocation2 + $0x180] sm:$0xff]
    %v217 = vld [vmem:[#allocation2 + $0x188] sm:$0xff]
    %v218 = vld [vmem:[#allocation2 + $0x190] sm:$0xff]
    %v219 = vld [vmem:[#allocation2 + $0x198] sm:$0xff]
    %v220 = vld [vmem:[#allocation2 + $0x1a0] sm:$0xff]
    %v221 = vld [vmem:[#allocation2 + $0x1a8] sm:$0xff]
    %v222 = vld [vmem:[#allocation2 + $0x1b0] sm:$0xff]
    %v223 = vld [vmem:[#allocation2 + $0x1b8] sm:$0xff]
    %v224 = vld [vmem:[#allocation2 + $0x1c0] sm:$0xff]
    %v225 = vld [vmem:[#allocation2 + $0x1c8] sm:$0xff]
    %v226 = vld [vmem:[#allocation2 + $0x1d0] sm:$0xff]
    %v227 = vld [vmem:[#allocation2 + $0x1d8] sm:$0xff]
    %v228 = vld [vmem:[#allocation2 + $0x1e0] sm:$0xff]
    %v229 = vld [vmem:[#allocation2 + $0x1e8] sm:$0xff]
    %v230 = vld [vmem:[#allocation2 + $0x1f0] sm:$0xff]
    %v231 = vld [vmem:[#allocation2 + $0x1f8] sm:$0xff]
    %v232 = vld [vmem:[%s4] sm:$0x3]
    %v234 = vperm.slane %v232, 0
    %v235 = vperm.slane %v232, 1
    %v302 = vunpack.c.l.b16 %v168
    %v303 = vunpack.c.h.b16 %v168
    %v304 = vunpack.c.l.b16 %v169
    %v305 = vunpack.c.h.b16 %v169
    %v306 = vunpack.c.l.b16 %v170
    %v307 = vunpack.c.h.b16 %v170
    %v308 = vunpack.c.l.b16 %v171
    %v309 = vunpack.c.h.b16 %v171
    %v310 = vunpack.c.l.b16 %v172
    %v311 = vunpack.c.h.b16 %v172
    %v312 = vunpack.c.l.b16 %v173
    %v313 = vunpack.c.h.b16 %v173
    %v314 = vunpack.c.l.b16 %v174
    %v315 = vunpack.c.h.b16 %v174
    %v316 = vunpack.c.l.b16 %v175
    %v317 = vunpack.c.h.b16 %v175
    %v318 = vunpack.c.l.b16 %v176
    %v319 = vunpack.c.h.b16 %v176
    %v320 = vunpack.c.l.b16 %v177
    %v321 = vunpack.c.h.b16 %v177
    %v322 = vunpack.c.l.b16 %v178
    %v323 = vunpack.c.h.b16 %v178
    %v324 = vunpack.c.l.b16 %v179
    %v325 = vunpack.c.h.b16 %v179
    %v326 = vunpack.c.l.b16 %v180
    %v327 = vunpack.c.h.b16 %v180
    %v328 = vunpack.c.l.b16 %v181
    %v329 = vunpack.c.h.b16 %v181
    %v330 = vunpack.c.l.b16 %v182
    %v331 = vunpack.c.h.b16 %v182
    %v332 = vunpack.c.l.b16 %v183
    %v333 = vunpack.c.h.b16 %v183
    %v334 = vunpack.c.l.b16 %v184
    %v335 = vunpack.c.h.b16 %v184
    %v336 = vunpack.c.l.b16 %v185
    %v337 = vunpack.c.h.b16 %v185
    %v338 = vunpack.c.l.b16 %v186
    %v339 = vunpack.c.h.b16 %v186
    %v340 = vunpack.c.l.b16 %v187
    %v341 = vunpack.c.h.b16 %v187
    %v342 = vunpack.c.l.b16 %v188
    %v343 = vunpack.c.h.b16 %v188
    %v344 = vunpack.c.l.b16 %v189
    %v345 = vunpack.c.h.b16 %v189
    %v346 = vunpack.c.l.b16 %v190
    %v347 = vunpack.c.h.b16 %v190
    %v348 = vunpack.c.l.b16 %v191
    %v349 = vunpack.c.h.b16 %v191
    %v350 = vunpack.c.l.b16 %v192
    %v351 = vunpack.c.h.b16 %v192
    %v352 = vunpack.c.l.b16 %v193
    %v353 = vunpack.c.h.b16 %v193
    %v354 = vunpack.c.l.b16 %v194
    %v355 = vunpack.c.h.b16 %v194
    %v356 = vunpack.c.l.b16 %v195
    %v357 = vunpack.c.h.b16 %v195
    %v358 = vunpack.c.l.b16 %v196
    %v359 = vunpack.c.h.b16 %v196
    %v360 = vunpack.c.l.b16 %v197
    %v361 = vunpack.c.h.b16 %v197
    %v362 = vunpack.c.l.b16 %v198
    %v363 = vunpack.c.h.b16 %v198
    %v364 = vunpack.c.l.b16 %v199
    %v365 = vunpack.c.h.b16 %v199
    %v366 = vunpack.c.l.b16 %v200
    %v367 = vunpack.c.h.b16 %v200
    %v368 = vunpack.c.l.b16 %v201
    %v369 = vunpack.c.h.b16 %v201
    %v370 = vunpack.c.l.b16 %v202
    %v371 = vunpack.c.h.b16 %v202
    %v372 = vunpack.c.l.b16 %v203
    %v373 = vunpack.c.h.b16 %v203
    %v374 = vunpack.c.l.b16 %v204
    %v375 = vunpack.c.h.b16 %v204
    %v376 = vunpack.c.l.b16 %v205
    %v377 = vunpack.c.h.b16 %v205
    %v378 = vunpack.c.l.b16 %v206
    %v379 = vunpack.c.h.b16 %v206
    %v380 = vunpack.c.l.b16 %v207
    %v381 = vunpack.c.h.b16 %v207
    %v382 = vunpack.c.l.b16 %v208
    %v383 = vunpack.c.h.b16 %v208
    %v384 = vunpack.c.l.b16 %v209
    %v385 = vunpack.c.h.b16 %v209
    %v386 = vunpack.c.l.b16 %v210
    %v387 = vunpack.c.h.b16 %v210
    %v388 = vunpack.c.l.b16 %v211
    %v389 = vunpack.c.h.b16 %v211
    %v390 = vunpack.c.l.b16 %v212
    %v391 = vunpack.c.h.b16 %v212
    %v392 = vunpack.c.l.b16 %v213
    %v393 = vunpack.c.h.b16 %v213
    %v394 = vunpack.c.l.b16 %v214
    %v395 = vunpack.c.h.b16 %v214
    %v396 = vunpack.c.l.b16 %v215
    %v397 = vunpack.c.h.b16 %v215
    %v398 = vunpack.c.l.b16 %v216
    %v399 = vunpack.c.h.b16 %v216
    %v400 = vunpack.c.l.b16 %v217
    %v401 = vunpack.c.h.b16 %v217
    %v402 = vunpack.c.l.b16 %v218
    %v403 = vunpack.c.h.b16 %v218
    %v404 = vunpack.c.l.b16 %v219
    %v405 = vunpack.c.h.b16 %v219
    %v406 = vunpack.c.l.b16 %v220
    %v407 = vunpack.c.h.b16 %v220
    %v408 = vunpack.c.l.b16 %v221
    %v409 = vunpack.c.h.b16 %v221
    %v410 = vunpack.c.l.b16 %v222
    %v411 = vunpack.c.h.b16 %v222
    %v412 = vunpack.c.l.b16 %v223
    %v413 = vunpack.c.h.b16 %v223
    %v414 = vunpack.c.l.b16 %v224
    %v415 = vunpack.c.h.b16 %v224
    %v416 = vunpack.c.l.b16 %v225
    %v417 = vunpack.c.h.b16 %v225
    %v418 = vunpack.c.l.b16 %v226
    %v419 = vunpack.c.h.b16 %v226
    %v420 = vunpack.c.l.b16 %v227
    %v421 = vunpack.c.h.b16 %v227
    %v422 = vunpack.c.l.b16 %v228
    %v423 = vunpack.c.h.b16 %v228
    %v424 = vunpack.c.l.b16 %v229
    %v425 = vunpack.c.h.b16 %v229
    %v426 = vunpack.c.l.b16 %v230
    %v427 = vunpack.c.h.b16 %v230
    %v428 = vunpack.c.l.b16 %v231
    %v429 = vunpack.c.h.b16 %v231
    %v430 = vpack.c.b16 %v304, %v302
    %v431 = vpack.c.b16 %v305, %v303
    %v432 = vpack.c.b16 %v308, %v306
    %v433 = vpack.c.b16 %v309, %v307
    %v434 = vpack.c.b16 %v312, %v310
    %v435 = vpack.c.b16 %v313, %v311
    %v436 = vpack.c.b16 %v316, %v314
    %v437 = vpack.c.b16 %v317, %v315
    %v438 = vpack.c.b16 %v320, %v318
    %v439 = vpack.c.b16 %v321, %v319
    %v440 = vpack.c.b16 %v324, %v322
    %v441 = vpack.c.b16 %v325, %v323
    %v442 = vpack.c.b16 %v328, %v326
    %v443 = vpack.c.b16 %v329, %v327
    %v444 = vpack.c.b16 %v332, %v330
    %v445 = vpack.c.b16 %v333, %v331
    %v446 = vpack.c.b16 %v336, %v334
    %v447 = vpack.c.b16 %v337, %v335
    %v448 = vpack.c.b16 %v340, %v338
    %v449 = vpack.c.b16 %v341, %v339
    %v450 = vpack.c.b16 %v344, %v342
    %v451 = vpack.c.b16 %v345, %v343
    %v452 = vpack.c.b16 %v348, %v346
    %v453 = vpack.c.b16 %v349, %v347
    %v454 = vpack.c.b16 %v352, %v350
    %v455 = vpack.c.b16 %v353, %v351
    %v456 = vpack.c.b16 %v356, %v354
    %v457 = vpack.c.b16 %v357, %v355
    %v458 = vpack.c.b16 %v360, %v358
    %v459 = vpack.c.b16 %v361, %v359
    %v460 = vpack.c.b16 %v364, %v362
    %v461 = vpack.c.b16 %v365, %v363
    %v462 = vpack.c.b16 %v368, %v366
    %v463 = vpack.c.b16 %v369, %v367
    %v464 = vpack.c.b16 %v372, %v370
    %v465 = vpack.c.b16 %v373, %v371
    %v466 = vpack.c.b16 %v376, %v374
    %v467 = vpack.c.b16 %v377, %v375
    %v468 = vpack.c.b16 %v380, %v378
    %v469 = vpack.c.b16 %v381, %v379
    %v470 = vpack.c.b16 %v384, %v382
    %v471 = vpack.c.b16 %v385, %v383
    %v472 = vpack.c.b16 %v388, %v386
    %v473 = vpack.c.b16 %v389, %v387
    %v474 = vpack.c.b16 %v392, %v390
    %v475 = vpack.c.b16 %v393, %v391
    %v476 = vpack.c.b16 %v396, %v394
    %v477 = vpack.c.b16 %v397, %v395
    %v478 = vpack.c.b16 %v400, %v398
    %v479 = vpack.c.b16 %v401, %v399
    %v480 = vpack.c.b16 %v404, %v402
    %v481 = vpack.c.b16 %v405, %v403
    %v482 = vpack.c.b16 %v408, %v406
    %v483 = vpack.c.b16 %v409, %v407
    %v484 = vpack.c.b16 %v412, %v410
    %v485 = vpack.c.b16 %v413, %v411
    %v486 = vpack.c.b16 %v416, %v414
    %v487 = vpack.c.b16 %v417, %v415
    %v488 = vpack.c.b16 %v420, %v418
    %v489 = vpack.c.b16 %v421, %v419
    %v490 = vpack.c.b16 %v424, %v422
    %v491 = vpack.c.b16 %v425, %v423
    %v492 = vpack.c.b16 %v428, %v426
    %v493 = vpack.c.b16 %v429, %v427
    %558 = vmatpush.bf16.msra.mxu0 %v444
    %559 = vmatpush.bf16.msra.mxu0 %v442
    %560 = vmatpush.bf16.msra.mxu0 %v440
    %561 = vmatpush.bf16.msra.mxu0 %v438
    %562 = vmatpush.bf16.msra.mxu0 %v436
    %563 = vmatpush.bf16.msra.mxu0 %v434
    %564 = vmatpush.bf16.msra.mxu0 %v432
    %565 = vmatpush.bf16.msra.mxu0 %v430
    %566 = vmatmul.bf16.gmra.mxu0 %v164
    %v567 = vpop.f32.mrf.mxu0
    %v568 = vadd.f32 %v234, %v567
    %v569 = vpop.f32.mrf.mxu0
    %570 = vdwg.mxu0
    %571 = vmatpush.bf16.msra.mxu0 %v460
    %572 = vmatpush.bf16.msra.mxu0 %v458
    %573 = vmatpush.bf16.msra.mxu0 %v456
    %574 = vmatpush.bf16.msra.mxu0 %v454
    %575 = vmatpush.bf16.msra.mxu0 %v452
    %576 = vmatpush.bf16.msra.mxu0 %v450
    %577 = vmatpush.bf16.msra.mxu0 %v448
    %578 = vmatpush.bf16.msra.mxu0 %v446
    %579 = vmatmul.bf16.gmra.mxu0 %v165
    %v580 = vpop.f32.mrf.mxu0
    %v581 = vadd.f32 %v568, %v580
    %v582 = vpop.f32.mrf.mxu0
    %583 = vdwg.mxu0
    %584 = vmatpush.bf16.msra.mxu0 %v476
    %585 = vmatpush.bf16.msra.mxu0 %v474
    %586 = vmatpush.bf16.msra.mxu0 %v472
    %587 = vmatpush.bf16.msra.mxu0 %v470
    %588 = vmatpush.bf16.msra.mxu0 %v468
    %589 = vmatpush.bf16.msra.mxu0 %v466
    %590 = vmatpush.bf16.msra.mxu0 %v464
    %591 = vmatpush.bf16.msra.mxu0 %v462
    %592 = vmatmul.bf16.gmra.mxu0 %v166
    %v593 = vpop.f32.mrf.mxu0
    %v594 = vadd.f32 %v581, %v593
    %v595 = vpop.f32.mrf.mxu0
    %596 = vdwg.mxu0
    %597 = vmatpush.bf16.msra.mxu0 %v492
    %598 = vmatpush.bf16.msra.mxu0 %v490
    %599 = vmatpush.bf16.msra.mxu0 %v488
    %600 = vmatpush.bf16.msra.mxu0 %v486
    %601 = vmatpush.bf16.msra.mxu0 %v484
    %602 = vmatpush.bf16.msra.mxu0 %v482
    %603 = vmatpush.bf16.msra.mxu0 %v480
    %604 = vmatpush.bf16.msra.mxu0 %v478
    %605 = vmatmul.bf16.gmra.mxu0 %v167
    %v606 = vpop.f32.mrf.mxu0
    %v607 = vadd.f32 %v594, %v606
    %v608 = vpop.f32.mrf.mxu0
    %609 = vdwg.mxu0
    %610 = vmatpush.bf16.msra.mxu0 %v445
    %611 = vmatpush.bf16.msra.mxu0 %v443
    %612 = vmatpush.bf16.msra.mxu0 %v441
    %613 = vmatpush.bf16.msra.mxu0 %v439
    %614 = vmatpush.bf16.msra.mxu0 %v437
    %615 = vmatpush.bf16.msra.mxu0 %v435
    %616 = vmatpush.bf16.msra.mxu0 %v433
    %617 = vmatpush.bf16.msra.mxu0 %v431
    %618 = vmatmul.bf16.gmra.mxu0 %v164
    %v619 = vpop.f32.mrf.mxu0
    %v620 = vadd.f32 %v235, %v619
    %v621 = vpop.f32.mrf.mxu0
    %622 = vdwg.mxu0
    %623 = vmatpush.bf16.msra.mxu0 %v461
    %624 = vmatpush.bf16.msra.mxu0 %v459
    %625 = vmatpush.bf16.msra.mxu0 %v457
    %626 = vmatpush.bf16.msra.mxu0 %v455
    %627 = vmatpush.bf16.msra.mxu0 %v453
    %628 = vmatpush.bf16.msra.mxu0 %v451
    %629 = vmatpush.bf16.msra.mxu0 %v449
    %630 = vmatpush.bf16.msra.mxu0 %v447
    %631 = vmatmul.bf16.gmra.mxu0 %v165
    %v632 = vpop.f32.mrf.mxu0
    %v633 = vadd.f32 %v620, %v632
    %v634 = vpop.f32.mrf.mxu0
    %635 = vdwg.mxu0
    %636 = vmatpush.bf16.msra.mxu0 %v477
    %637 = vmatpush.bf16.msra.mxu0 %v475
    %638 = vmatpush.bf16.msra.mxu0 %v473
    %639 = vmatpush.bf16.msra.mxu0 %v471
    %640 = vmatpush.bf16.msra.mxu0 %v469
    %641 = vmatpush.bf16.msra.mxu0 %v467
    %642 = vmatpush.bf16.msra.mxu0 %v465
    %643 = vmatpush.bf16.msra.mxu0 %v463
    %644 = vmatmul.bf16.gmra.mxu0 %v166
    %v645 = vpop.f32.mrf.mxu0
    %v646 = vadd.f32 %v633, %v645
    %v647 = vpop.f32.mrf.mxu0
    %648 = vdwg.mxu0
    %649 = vmatpush.bf16.msra.mxu0 %v493
    %650 = vmatpush.bf16.msra.mxu0 %v491
    %651 = vmatpush.bf16.msra.mxu0 %v489
    %652 = vmatpush.bf16.msra.mxu0 %v487
    %653 = vmatpush.bf16.msra.mxu0 %v485
    %654 = vmatpush.bf16.msra.mxu0 %v483
    %655 = vmatpush.bf16.msra.mxu0 %v481
    %656 = vmatpush.bf16.msra.mxu0 %v479
    %657 = vmatmul.bf16.gmra.mxu0 %v167
    %v658 = vpop.f32.mrf.mxu0
    %v659 = vadd.f32 %v646, %v658
    %v660 = vpop.f32.mrf.mxu0
    %661 = vdwg.mxu0
    %v662 = vmax.f32 %v607, 0.0
    %v663 = vmax.f32 %v659, 0.0
    %v664 = vpack.c.bf16 %v662, %v662
    %v665 = vpack.c.bf16 %v663, %v663
    %v666 = vld [vmem:[%s5] sm:$0xf]
    %v667 = vld [vmem:[%s5 + $0x4] sm:$0xf]
    %v668 = vld [vmem:[%s5 + $0x8] sm:$0xf]
    %v669 = vld [vmem:[%s5 + $0xc] sm:$0xf]
    %v670 = vld [vmem:[%s5 + $0x10] sm:$0xf]
    %v671 = vld [vmem:[%s5 + $0x14] sm:$0xf]
    %v672 = vld [vmem:[%s5 + $0x18] sm:$0xf]
    %v673 = vld [vmem:[%s5 + $0x1c] sm:$0xf]
    %v674 = vld [vmem:[%s5 + $0x20] sm:$0xf]
    %v675 = vld [vmem:[%s5 + $0x24] sm:$0xf]
    %v676 = vld [vmem:[%s5 + $0x28] sm:$0xf]
    %v677 = vld [vmem:[%s5 + $0x2c] sm:$0xf]
    %v678 = vld [vmem:[%s5 + $0x30] sm:$0xf]
    %v679 = vld [vmem:[%s5 + $0x34] sm:$0xf]
    %v680 = vld [vmem:[%s5 + $0x38] sm:$0xf]
    %v681 = vld [vmem:[%s5 + $0x3c] sm:$0xf]
    %v682 = vld [vmem:[%s5 + $0x40] sm:$0xf]
    %v683 = vld [vmem:[%s5 + $0x44] sm:$0xf]
    %v684 = vld [vmem:[%s5 + $0x48] sm:$0xf]
    %v685 = vld [vmem:[%s5 + $0x4c] sm:$0xf]
    %v686 = vld [vmem:[%s5 + $0x50] sm:$0xf]
    %v687 = vld [vmem:[%s5 + $0x54] sm:$0xf]
    %v688 = vld [vmem:[%s5 + $0x58] sm:$0xf]
    %v689 = vld [vmem:[%s5 + $0x5c] sm:$0xf]
    %v690 = vld [vmem:[%s5 + $0x60] sm:$0xf]
    %v691 = vld [vmem:[%s5 + $0x64] sm:$0xf]
    %v692 = vld [vmem:[%s5 + $0x68] sm:$0xf]
    %v693 = vld [vmem:[%s5 + $0x6c] sm:$0xf]
    %v694 = vld [vmem:[%s5 + $0x70] sm:$0xf]
    %v695 = vld [vmem:[%s5 + $0x74] sm:$0xf]
    %v696 = vld [vmem:[%s5 + $0x78] sm:$0xf]
    %v697 = vld [vmem:[%s5 + $0x7c] sm:$0xf]
    %v698 = vld [vmem:[%s6] sm:$0x1]
    %v700 = vperm.slane %v698, 0
    %v734 = vunpack.c.l.b16 %v666
    %v735 = vunpack.c.l.b16 %v667
    %v736 = vunpack.c.l.b16 %v668
    %v737 = vunpack.c.l.b16 %v669
    %v738 = vunpack.c.l.b16 %v670
    %v739 = vunpack.c.l.b16 %v671
    %v740 = vunpack.c.l.b16 %v672
    %v741 = vunpack.c.l.b16 %v673
    %v742 = vunpack.c.l.b16 %v674
    %v743 = vunpack.c.l.b16 %v675
    %v744 = vunpack.c.l.b16 %v676
    %v745 = vunpack.c.l.b16 %v677
    %v746 = vunpack.c.l.b16 %v678
    %v747 = vunpack.c.l.b16 %v679
    %v748 = vunpack.c.l.b16 %v680
    %v749 = vunpack.c.l.b16 %v681
    %v750 = vunpack.c.l.b16 %v682
    %v751 = vunpack.c.l.b16 %v683
    %v752 = vunpack.c.l.b16 %v684
    %v753 = vunpack.c.l.b16 %v685
    %v754 = vunpack.c.l.b16 %v686
    %v755 = vunpack.c.l.b16 %v687
    %v756 = vunpack.c.l.b16 %v688
    %v757 = vunpack.c.l.b16 %v689
    %v758 = vunpack.c.l.b16 %v690
    %v759 = vunpack.c.l.b16 %v691
    %v760 = vunpack.c.l.b16 %v692
    %v761 = vunpack.c.l.b16 %v693
    %v762 = vunpack.c.l.b16 %v694
    %v763 = vunpack.c.l.b16 %v695
    %v764 = vunpack.c.l.b16 %v696
    %v765 = vunpack.c.l.b16 %v697
    %v766 = vpack.c.b16 %v735, %v734
    %v767 = vpack.c.b16 %v737, %v736
    %v768 = vpack.c.b16 %v739, %v738
    %v769 = vpack.c.b16 %v741, %v740
    %v770 = vpack.c.b16 %v743, %v742
    %v771 = vpack.c.b16 %v745, %v744
    %v772 = vpack.c.b16 %v747, %v746
    %v773 = vpack.c.b16 %v749, %v748
    %v774 = vpack.c.b16 %v751, %v750
    %v775 = vpack.c.b16 %v753, %v752
    %v776 = vpack.c.b16 %v755, %v754
    %v777 = vpack.c.b16 %v757, %v756
    %v778 = vpack.c.b16 %v759, %v758
    %v779 = vpack.c.b16 %v761, %v760
    %v780 = vpack.c.b16 %v763, %v762
    %v781 = vpack.c.b16 %v765, %v764
    %798 = vmatpush.bf16.msra.mxu0 %v773
    %799 = vmatpush.bf16.msra.mxu0 %v772
    %800 = vmatpush.bf16.msra.mxu0 %v771
    %801 = vmatpush.bf16.msra.mxu0 %v770
    %802 = vmatpush.bf16.msra.mxu0 %v769
    %803 = vmatpush.bf16.msra.mxu0 %v768
    %804 = vmatpush.bf16.msra.mxu0 %v767
    %805 = vmatpush.bf16.msra.mxu0 %v766
    %806 = vmatmul.bf16.gmra.mxu0 %v664
    %v807 = vpop.f32.mrf.mxu0
    %v808 = vadd.f32 %v700, %v807
    %v809 = vpop.f32.mrf.mxu0
    %810 = vdwg.mxu0
    %811 = vmatpush.bf16.msra.mxu0 %v781
    %812 = vmatpush.bf16.msra.mxu0 %v780
    %813 = vmatpush.bf16.msra.mxu0 %v779
    %814 = vmatpush.bf16.msra.mxu0 %v778
    %815 = vmatpush.bf16.msra.mxu0 %v777
    %816 = vmatpush.bf16.msra.mxu0 %v776
    %817 = vmatpush.bf16.msra.mxu0 %v775
    %818 = vmatpush.bf16.msra.mxu0 %v774
    %819 = vmatmul.bf16.gmra.mxu0 %v665
    %v820 = vpop.f32.mrf.mxu0
    %v821 = vadd.f32 %v808, %v820
    %v822 = vpop.f32.mrf.mxu0
    %823 = vdwg.mxu0
    %v824 = vtanh.pop %v821
    %vm825 = vcmask 64512
    %826 = vst.msk [vmem:[#allocation5] sm:$0xff] %vm825, %v824
    // Predicated region
    $region34: #{tpu_custom_call.1} parent=1 // pred_check
      _
    $region35: #{tpu_custom_call.1} parent=1 // pred_check_branch
      %828 = sbr.rel (0) target = $region37
    $region36: #{tpu_custom_call.1} parent=1 // pred_region
      %830 = vsyncadd [#allocation4], 0
      %s832 = sshll.u32 [#allocation5], 4
      %s833 = int_to_ptr.vmem [resolvable:$true] %s832
      %s834 = sshll.u32 %s7, 4
      %s835 = int_to_ptr.hbm [resolvable:$true] %s834
      %837 = dma.vmem_to_hbm [thread:$0]  %s833, 128, %s835, [#allocation4]
    $region37: #{tpu_custom_call.1} parent=1 // pred_fallthru
      _
    // Predicated region
    $region38: #{tpu_custom_call.1} parent=1 // pred_check
      _
    $region39: #{tpu_custom_call.1} parent=1 // pred_check_branch
      %839 = sbr.rel (0) target = $region41
    $region40: #{tpu_custom_call.1} parent=1 // pred_region
      %841 = dma.done [#allocation4], 128
    $region41: #{tpu_custom_call.1} parent=1 // pred_fallthru
      _
    %842 = vsyncpa [#allocation3], 1
    %843 = vsyncpa [#allocation4], 1

</llo_original>
